<compile_context>
chip_gen: v7x
topology: tpu7x:2x2x1
jax: 0.10.0
libtpu: 0.0.40
codegen_flags: <defaults>
</compile_context>

<pallas_src>
import functools

import jax
import jax.numpy as jnp
from jax.experimental import pallas as pl
from jax.experimental.pallas import tpu as pltpu


def _mse_gdl_kernel(x_ref, y_ref, o_ref, *, lambda_mse, lambda_gdl, inv_numel,
                    rows_total, block_rows, mask_tail, has_h_diff, has_w_diff):
    # Single read of each operand tile; all math hides under the HBM stream.
    d = x_ref[...].astype(jnp.float32) - y_ref[...].astype(jnp.float32)  # (n, H, W)

    if mask_tail:
        # Last grid step may extend past N: zero whole out-of-bounds images so
        # they contribute nothing to any term (all diffs are within an image).
        row0 = pl.program_id(0) * block_rows
        row_idx = jax.lax.broadcasted_iota(jnp.int32, (d.shape[0], 1, 1), 0)
        d = jnp.where(row0 + row_idx < rows_total, d, 0.0)

    acc = lambda_mse * jnp.sum(d * d)                     # MSE term
    if has_w_diff:
        di = d[:, :, 1:] - d[:, :, :-1]                   # gradient diff along W
        acc = acc + lambda_gdl * jnp.sum(di * di)
    if has_h_diff:
        dj = d[:, 1:, :] - d[:, :-1, :]                   # gradient diff along H
        acc = acc + lambda_gdl * jnp.sum(dj * dj)

    partial = acc * inv_numel
    # Lane-dense (8,128) partial block -> single unmasked store per grid step.
    o_ref[...] = jnp.full(o_ref.shape, partial, dtype=o_ref.dtype)


def mse_and_gdl(inputs, targets, lambda_mse=0.0, lambda_gdl=0.1, *,
                block_rows=None, vmem_block_bytes=1 * 1024 * 1024):
    """Pallas implementation of MSE_and_GDL.forward for >=2-D inputs (e.g. NCHW)."""
    assert inputs.shape == targets.shape, "inputs/targets must have the same shape"
    assert inputs.ndim >= 2, "need at least 2 dims for axis=-1 / axis=-2 diffs"
    *lead, H, W = inputs.shape
    N = 1
    for s in lead:
        N *= int(s)
    N = max(int(N), 1)
    numel = int(inputs.size)

    x = inputs.reshape(N, H, W)
    y = targets.reshape(N, H, W)

    itemsize = jnp.dtype(inputs.dtype).itemsize
    if block_rows is None:
        # ~vmem_block_bytes per operand block; 2 operands x double-buffering plus
        # f32 compute temporaries stays well under the scoped-VMEM limit below.
        block_rows = max(1, vmem_block_bytes // (H * W * itemsize))
    block_rows = int(max(1, min(int(block_rows), N)))
    # TODO(synk): a single image whose H*W alone exceeds VMEM would need inner
    # spatial tiling with halo handling for the diffs; not implemented here.

    num_blocks = (N + block_rows - 1) // block_rows
    mask_tail = (N % block_rows) != 0   # ragged tail handled in-kernel (no jnp.pad pass)

    kernel = functools.partial(
        _mse_gdl_kernel,
        lambda_mse=float(lambda_mse),
        lambda_gdl=float(lambda_gdl),
        inv_numel=1.0 / float(numel),
        rows_total=N,
        block_rows=block_rows,
        mask_tail=mask_tail,
        has_h_diff=H > 1,
        has_w_diff=W > 1,
    )

    partials = pl.pallas_call(
        kernel,
        out_shape=jax.ShapeDtypeStruct((num_blocks, 8, 128), jnp.float32),
        grid=(num_blocks,),
        in_specs=[
            pl.BlockSpec((block_rows, H, W), lambda i: (i, 0, 0)),
            pl.BlockSpec((block_rows, H, W), lambda i: (i, 0, 0)),
        ],
        out_specs=pl.BlockSpec((1, 8, 128), lambda i: (i, 0, 0)),
        compiler_params=pltpu.CompilerParams(
            # Independent per-block partial sums -> parallel axis (2 TCs on v7x).
            dimension_semantics=("parallel",),
            vmem_limit_bytes=32 * 1024 * 1024,
        ),
    )(x, y)

    # Tiny final reduction over per-block partials (exact: each block wrote the
    # same scalar across its (8,128) tile; pick one element per block).
    return jnp.sum(partials[:, 0, 0])


def mse_and_gdl_ref(inputs, targets, lambda_mse=0.0, lambda_gdl=0.1):
    """Pure-JAX reference mirroring the PyTorch forward."""
    se = jnp.sum((inputs - targets) ** 2)
    gdi = jnp.sum((jnp.diff(inputs, axis=-1) - jnp.diff(targets, axis=-1)) ** 2)
    gdj = jnp.sum((jnp.diff(inputs, axis=-2) - jnp.diff(targets, axis=-2)) ** 2)
    return (lambda_mse * se + lambda_gdl * gdi + lambda_gdl * gdj) / inputs.size


if __name__ == "__main__":
    key = jax.random.PRNGKey(0)
    B, C, H, W = 2, 4, 16, 16
    k1, k2 = jax.random.split(key)
    inputs = jax.random.normal(k1, (B, C, H, W), dtype=jnp.float32)
    targets = jax.random.normal(k2, (B, C, H, W), dtype=jnp.float32)

    # Default lambdas (lambda_mse=0, lambda_gdl=0.1), auto tiling (single block).
    loss = mse_and_gdl(inputs, targets)
    jax.block_until_ready(loss)
    ref = mse_and_gdl_ref(inputs, targets)
    assert jnp.allclose(loss, ref, atol=1e-5, rtol=1e-5), (loss, ref)

    # Non-default lambdas + forced multi-block grid with a ragged tail
    # (N=8, block_rows=3) to exercise the in-kernel masking path.
    loss2 = mse_and_gdl(inputs, targets, lambda_mse=1.0, lambda_gdl=0.25, block_rows=3)
    jax.block_until_ready(loss2)
    ref2 = mse_and_gdl_ref(inputs, targets, lambda_mse=1.0, lambda_gdl=0.25)
    assert jnp.allclose(loss2, ref2, atol=1e-5, rtol=1e-5), (loss2, ref2)

    print("KERNEL_OK")
</pallas_src>

<mosaic_0001>
module attributes {stable_mosaic.version = 11 : i64} {
  func.func @_mse_gdl_kernel(%arg0: i32, %arg1: memref<8x16x16xf32, #tpu.memory_space<vmem>>, %arg2: memref<8x16x16xf32, #tpu.memory_space<vmem>>, %arg3: memref<1x8x128xf32, #tpu.memory_space<vmem>>) attributes {dimension_semantics = [#tpu.dimension_semantics<parallel>], iteration_bounds = array<i64: 1>, scalar_prefetch = 0 : i64, scratch_operands = 0 : i64, tpu.core_type = #tpu.core_type<tc>, window_params = [{transform_indices = @transform_0, window_bounds = array<i64: 8, 16, 16>}, {transform_indices = @transform_1, window_bounds = array<i64: 8, 16, 16>}, {transform_indices = @transform_2, window_bounds = array<i64: 1, 8, 128>}]} {
    %c0 = arith.constant 0 : index
    %c0_0 = arith.constant 0 : index
    %c0_1 = arith.constant 0 : index
    %0 = vector.load %arg1[%c0, %c0_0, %c0_1] : memref<8x16x16xf32, #tpu.memory_space<vmem>>, vector<8x16x16xf32>
    %c0_2 = arith.constant 0 : index
    %c0_3 = arith.constant 0 : index
    %c0_4 = arith.constant 0 : index
    %1 = vector.load %arg2[%c0_2, %c0_3, %c0_4] : memref<8x16x16xf32, #tpu.memory_space<vmem>>, vector<8x16x16xf32>
    %2 = arith.subf %0, %1 : vector<8x16x16xf32>
    %3 = arith.mulf %2, %2 : vector<8x16x16xf32>
    %4 = vector.shape_cast %3 : vector<8x16x16xf32> to vector<1x8x16x16xf32>
    %cst = arith.constant dense<0.000000e+00> : vector<1xf32>
    %5 = vector.multi_reduction <add>, %4, %cst [1, 2, 3] : vector<1x8x16x16xf32> to vector<1xf32>
    %6 = vector.shape_cast %5 : vector<1xf32> to vector<1x1x1x1xf32>
    %7 = vector.extract %6[0, 0, 0, 0] : f32 from vector<1x1x1x1xf32>
    %cst_5 = arith.constant 0.000000e+00 : f32
    %8 = arith.mulf %cst_5, %7 : f32
    %9 = vector.extract_strided_slice %2 {offsets = [0, 0, 1], sizes = [8, 16, 15], strides = [1, 1, 1]} : vector<8x16x16xf32> to vector<8x16x15xf32>
    %10 = vector.extract_strided_slice %2 {offsets = [0, 0, 0], sizes = [8, 16, 15], strides = [1, 1, 1]} : vector<8x16x16xf32> to vector<8x16x15xf32>
    %11 = arith.subf %9, %10 : vector<8x16x15xf32>
    %12 = arith.mulf %11, %11 : vector<8x16x15xf32>
    %13 = vector.shape_cast %12 : vector<8x16x15xf32> to vector<1x8x16x15xf32>
    %cst_6 = arith.constant dense<0.000000e+00> : vector<1xf32>
    %14 = vector.multi_reduction <add>, %13, %cst_6 [1, 2, 3] : vector<1x8x16x15xf32> to vector<1xf32>
    %15 = vector.shape_cast %14 : vector<1xf32> to vector<1x1x1x1xf32>
    %16 = vector.extract %15[0, 0, 0, 0] : f32 from vector<1x1x1x1xf32>
    %cst_7 = arith.constant 1.000000e-01 : f32
    %17 = arith.mulf %cst_7, %16 : f32
    %18 = arith.addf %8, %17 : f32
    %19 = vector.extract_strided_slice %2 {offsets = [0, 1, 0], sizes = [8, 15, 16], strides = [1, 1, 1]} : vector<8x16x16xf32> to vector<8x15x16xf32>
    %20 = vector.extract_strided_slice %2 {offsets = [0, 0, 0], sizes = [8, 15, 16], strides = [1, 1, 1]} : vector<8x16x16xf32> to vector<8x15x16xf32>
    %21 = arith.subf %19, %20 : vector<8x15x16xf32>
    %22 = arith.mulf %21, %21 : vector<8x15x16xf32>
    %23 = vector.shape_cast %22 : vector<8x15x16xf32> to vector<1x8x15x16xf32>
    %cst_8 = arith.constant dense<0.000000e+00> : vector<1xf32>
    %24 = vector.multi_reduction <add>, %23, %cst_8 [1, 2, 3] : vector<1x8x15x16xf32> to vector<1xf32>
    %25 = vector.shape_cast %24 : vector<1xf32> to vector<1x1x1x1xf32>
    %26 = vector.extract %25[0, 0, 0, 0] : f32 from vector<1x1x1x1xf32>
    %cst_9 = arith.constant 1.000000e-01 : f32
    %27 = arith.mulf %cst_9, %26 : f32
    %28 = arith.addf %18, %27 : f32
    %cst_10 = arith.constant 4.8828125E-4 : f32
    %29 = arith.mulf %28, %cst_10 : f32
    %30 = vector.broadcast %29 : f32 to vector<1x8x128xf32>
    %c0_11 = arith.constant 0 : index
    %c0_12 = arith.constant 0 : index
    %c0_13 = arith.constant 0 : index
    %31 = vector.load %arg3[%c0_11, %c0_12, %c0_13] : memref<1x8x128xf32, #tpu.memory_space<vmem>>, vector<1x8x128xf32>
    tpu.vector_store %arg3[%c0_11, %c0_12, %c0_13], %30 {strides = array<i32>} : memref<1x8x128xf32, #tpu.memory_space<vmem>>, vector<1x8x128xf32>,
    return
  }
  func.func @transform_0(%arg0: i32) -> (i32, i32, i32) {
    %c0_i32 = arith.constant 0 : i32
    %c0_i32_0 = arith.constant 0 : i32
    %c0_i32_1 = arith.constant 0 : i32
    return %arg0, %c0_i32, %c0_i32_0 : i32, i32, i32
  }
  func.func @transform_1(%arg0: i32) -> (i32, i32, i32) {
    %c0_i32 = arith.constant 0 : i32
    %c0_i32_0 = arith.constant 0 : i32
    %c0_i32_1 = arith.constant 0 : i32
    return %arg0, %c0_i32, %c0_i32_0 : i32, i32, i32
  }
  func.func @transform_2(%arg0: i32) -> (i32, i32, i32) {
    %c0_i32 = arith.constant 0 : i32
    %c0_i32_0 = arith.constant 0 : i32
    %c0_i32_1 = arith.constant 0 : i32
    return %arg0, %c0_i32, %c0_i32_0 : i32, i32, i32
  }
}

</mosaic_0001>

<llo_original>
// kernel: tpu_custom_call.1
$region0: #{tpu_custom_call.1}
  #allocation0 [shape = 'u32[]', space=smem, size = 0x4, offset = 0x4, fixed_abs, tag = 'smem constant byte address 0x4 - core index']
  #allocation1 [shape = 'u32[144,128]{1,0:T(1,128)}', space=vmem, size = 0x12000, scoped, tag = 'internal scratch']
  %s0 = inlined_call_operand.hbm [shape: f32[8,16,16], index: 0, kind: input, shape index: {}]
  %s1 = inlined_call_operand.hbm [shape: f32[8,16,16], index: 1, kind: input, shape index: {}]
  %s2 = inlined_call_operand.hbm [shape: f32[1,8,128], index: 2, kind: output, shape index: {}]
  %s3 = sld [smem:[#allocation0]]
  $region26: #{tpu_custom_call.1} parent=0
    _
  %s5 = ssub.s32 1, %s3
  %s6 = scalar_select 0, %s5, %s3
  $region1: #{tpu_custom_call.1} parent=0
    #allocation2 [shape = 'u8[65536]{0}', space=vmem, size = 0x10000, scoped, tag = 'input window, operand 0, single buffered']
    #allocation3 [shape = 's32[1]{0}', space=sflag, size = 0x4, scoped, tag = 'scoped memory for tpu_custom_call.1']
    #allocation4 [shape = 's32[1]{0}', space=sflag, size = 0x4, scoped, tag = 'scoped memory for tpu_custom_call.1']
    #allocation5 [shape = 'u8[65536]{0}', space=vmem, size = 0x10000, scoped, tag = 'input window, operand 1, single buffered']
    #allocation6 [shape = 's32[1]{0}', space=sflag, size = 0x4, scoped, tag = 'scoped memory for tpu_custom_call.1']
    #allocation7 [shape = 'u8[4096]{0}', space=vmem, size = 0x1000, scoped, tag = 'output window, operand 0, single buffered']
    %7 = vsyncpa [#allocation3], 0
    %8 = vsyncpa [#allocation6], 0
    %9 = vsyncpa [#allocation4], 0
    // Predicated region
    $region2: #{tpu_custom_call.1} parent=1 // pred_check
      _
    $region3: #{tpu_custom_call.1} parent=1 // pred_check_branch
      %11 = sbr.rel (0) target = $region5
    $region4: #{tpu_custom_call.1} parent=1 // pred_region
      %s13 = ssub.s32 2048, 2048
      %14 = vsyncadd [#allocation3], %s13
      %s15 = sshll.u32 [#allocation2], 4
      %s16 = int_to_ptr.vmem [resolvable:$true] %s15
      %21 = dma.hbm_to_vmem [thread:$0]  %s0, 2048, %s16, [#allocation3], 128, 128, 8
    $region5: #{tpu_custom_call.1} parent=1 // pred_fallthru
      _
    // Predicated region
    $region6: #{tpu_custom_call.1} parent=1 // pred_check
      _
    $region7: #{tpu_custom_call.1} parent=1 // pred_check_branch
      %23 = sbr.rel (0) target = $region9
    $region8: #{tpu_custom_call.1} parent=1 // pred_region
      %s25 = ssub.s32 2048, 2048
      %26 = vsyncadd [#allocation6], %s25
      %s27 = sshll.u32 [#allocation5], 4
      %s28 = int_to_ptr.vmem [resolvable:$true] %s27
      %33 = dma.hbm_to_vmem [thread:$0]  %s1, 2048, %s28, [#allocation6], 128, 128, 8
    $region9: #{tpu_custom_call.1} parent=1 // pred_fallthru
      _
    // Predicated region
    $region10: #{tpu_custom_call.1} parent=1 // pred_check
      _
    $region11: #{tpu_custom_call.1} parent=1 // pred_check_branch
      %35 = sbr.rel (0) target = $region13
    $region12: #{tpu_custom_call.1} parent=1 // pred_region
      %36 = dma.done [#allocation3], 2048
    $region13: #{tpu_custom_call.1} parent=1 // pred_fallthru
      _
    // Predicated region
    $region14: #{tpu_custom_call.1} parent=1 // pred_check
      _
    $region15: #{tpu_custom_call.1} parent=1 // pred_check_branch
      %38 = sbr.rel (0) target = $region17
    $region16: #{tpu_custom_call.1} parent=1 // pred_region
      %39 = dma.done [#allocation6], 2048
    $region17: #{tpu_custom_call.1} parent=1 // pred_fallthru
      _
    %v40 = vld [vmem:[#allocation2] sm:$0xff]
    %v41 = vld [vmem:[#allocation2 + $0x8] sm:$0xff]
    %v42 = vld [vmem:[#allocation2 + $0x10] sm:$0xff]
    %v43 = vld [vmem:[#allocation2 + $0x18] sm:$0xff]
    %v44 = vld [vmem:[#allocation2 + $0x20] sm:$0xff]
    %v45 = vld [vmem:[#allocation2 + $0x28] sm:$0xff]
    %v46 = vld [vmem:[#allocation2 + $0x30] sm:$0xff]
    %v47 = vld [vmem:[#allocation2 + $0x38] sm:$0xff]
    %v48 = vld [vmem:[#allocation2 + $0x40] sm:$0xff]
    %v49 = vld [vmem:[#allocation2 + $0x48] sm:$0xff]
    %v50 = vld [vmem:[#allocation2 + $0x50] sm:$0xff]
    %v51 = vld [vmem:[#allocation2 + $0x58] sm:$0xff]
    %v52 = vld [vmem:[#allocation2 + $0x60] sm:$0xff]
    %v53 = vld [vmem:[#allocation2 + $0x68] sm:$0xff]
    %v54 = vld [vmem:[#allocation2 + $0x70] sm:$0xff]
    %v55 = vld [vmem:[#allocation2 + $0x78] sm:$0xff]
    %v56 = vld [vmem:[#allocation5] sm:$0xff]
    %v57 = vld [vmem:[#allocation5 + $0x8] sm:$0xff]
    %v58 = vld [vmem:[#allocation5 + $0x10] sm:$0xff]
    %v59 = vld [vmem:[#allocation5 + $0x18] sm:$0xff]
    %v60 = vld [vmem:[#allocation5 + $0x20] sm:$0xff]
    %v61 = vld [vmem:[#allocation5 + $0x28] sm:$0xff]
    %v62 = vld [vmem:[#allocation5 + $0x30] sm:$0xff]
    %v63 = vld [vmem:[#allocation5 + $0x38] sm:$0xff]
    %v64 = vld [vmem:[#allocation5 + $0x40] sm:$0xff]
    %v65 = vld [vmem:[#allocation5 + $0x48] sm:$0xff]
    %v66 = vld [vmem:[#allocation5 + $0x50] sm:$0xff]
    %v67 = vld [vmem:[#allocation5 + $0x58] sm:$0xff]
    %v68 = vld [vmem:[#allocation5 + $0x60] sm:$0xff]
    %v69 = vld [vmem:[#allocation5 + $0x68] sm:$0xff]
    %v70 = vld [vmem:[#allocation5 + $0x70] sm:$0xff]
    %v71 = vld [vmem:[#allocation5 + $0x78] sm:$0xff]
    %v72 = vsub.f32 %v40, %v56
    %v73 = vsub.f32 %v41, %v57
    %v74 = vsub.f32 %v42, %v58
    %v75 = vsub.f32 %v43, %v59
    %v76 = vsub.f32 %v44, %v60
    %v77 = vsub.f32 %v45, %v61
    %v78 = vsub.f32 %v46, %v62
    %v79 = vsub.f32 %v47, %v63
    %v80 = vsub.f32 %v48, %v64
    %v81 = vsub.f32 %v49, %v65
    %v82 = vsub.f32 %v50, %v66
    %v83 = vsub.f32 %v51, %v67
    %v84 = vsub.f32 %v52, %v68
    %v85 = vsub.f32 %v53, %v69
    %v86 = vsub.f32 %v54, %v70
    %v87 = vsub.f32 %v55, %v71
    %v88 = vmul.f32 %v72, %v72
    %v89 = vmul.f32 %v73, %v73
    %v90 = vmul.f32 %v74, %v74
    %v91 = vmul.f32 %v75, %v75
    %v92 = vmul.f32 %v76, %v76
    %v93 = vmul.f32 %v77, %v77
    %v94 = vmul.f32 %v78, %v78
    %v95 = vmul.f32 %v79, %v79
    %v96 = vmul.f32 %v80, %v80
    %v97 = vmul.f32 %v81, %v81
    %v98 = vmul.f32 %v82, %v82
    %v99 = vmul.f32 %v83, %v83
    %v100 = vmul.f32 %v84, %v84
    %v101 = vmul.f32 %v85, %v85
    %v102 = vmul.f32 %v86, %v86
    %v103 = vmul.f32 %v87, %v87
    %vm104 = vcmask 130048
    %v105 = vsel %vm104, %v88, 0.0
    %v106 = vsel %vm104, %v89, 0.0
    %v107 = vadd.f32 %v105, %v106
    %v108 = vsel %vm104, %v90, 0.0
    %v109 = vadd.f32 %v107, %v108
    %v110 = vsel %vm104, %v91, 0.0
    %v111 = vadd.f32 %v109, %v110
    %v112 = vsel %vm104, %v92, 0.0
    %v113 = vadd.f32 %v111, %v112
    %v114 = vsel %vm104, %v93, 0.0
    %v115 = vadd.f32 %v113, %v114
    %v116 = vsel %vm104, %v94, 0.0
    %v117 = vadd.f32 %v115, %v116
    %v118 = vsel %vm104, %v95, 0.0
    %v119 = vadd.f32 %v117, %v118
    %v120 = vsel %vm104, %v96, 0.0
    %v121 = vadd.f32 %v119, %v120
    %v122 = vsel %vm104, %v97, 0.0
    %v123 = vadd.f32 %v121, %v122
    %v124 = vsel %vm104, %v98, 0.0
    %v125 = vadd.f32 %v123, %v124
    %v126 = vsel %vm104, %v99, 0.0
    %v127 = vadd.f32 %v125, %v126
    %v128 = vsel %vm104, %v100, 0.0
    %v129 = vadd.f32 %v127, %v128
    %v130 = vsel %vm104, %v101, 0.0
    %v131 = vadd.f32 %v129, %v130
    %v132 = vsel %vm104, %v102, 0.0
    %v133 = vadd.f32 %v131, %v132
    %v134 = vsel %vm104, %v103, 0.0
    %v135 = vadd.f32 %v133, %v134
    %136 = vadd.xlane.f32.xlu0 %v135
    %v137 = vpop.xlane.xlu0 %136
    %v138 = vrot.slane %v137, 4
    %v139 = vadd.f32 %v137, %v138
    %v140 = vrot.slane %v139, 2
    %v141 = vadd.f32 %v139, %v140
    %v142 = vrot.slane %v141, 1
    %v143 = vadd.f32 %v141, %v142
    %s144 = vtos %v143
    %s145 = smul.f32 %s144, 0.0
    %162 = vrot.lane.b32.xlu0 %v72, 1
    %v163 = vpop.permute.xlu0 %162
    %164 = vrot.lane.b32.xlu0 %v73, 1
    %v165 = vpop.permute.xlu0 %164
    %166 = vrot.lane.b32.xlu0 %v74, 1
    %v167 = vpop.permute.xlu0 %166
    %168 = vrot.lane.b32.xlu0 %v75, 1
    %v169 = vpop.permute.xlu0 %168
    %170 = vrot.lane.b32.xlu0 %v76, 1
    %v171 = vpop.permute.xlu0 %170
    %172 = vrot.lane.b32.xlu0 %v77, 1
    %v173 = vpop.permute.xlu0 %172
    %174 = vrot.lane.b32.xlu0 %v78, 1
    %v175 = vpop.permute.xlu0 %174
    %176 = vrot.lane.b32.xlu0 %v79, 1
    %v177 = vpop.permute.xlu0 %176
    %178 = vrot.lane.b32.xlu0 %v80, 1
    %v179 = vpop.permute.xlu0 %178
    %180 = vrot.lane.b32.xlu0 %v81, 1
    %v181 = vpop.permute.xlu0 %180
    %182 = vrot.lane.b32.xlu0 %v82, 1
    %v183 = vpop.permute.xlu0 %182
    %184 = vrot.lane.b32.xlu0 %v83, 1
    %v185 = vpop.permute.xlu0 %184
    %186 = vrot.lane.b32.xlu0 %v84, 1
    %v187 = vpop.permute.xlu0 %186
    %188 = vrot.lane.b32.xlu0 %v85, 1
    %v189 = vpop.permute.xlu0 %188
    %190 = vrot.lane.b32.xlu0 %v86, 1
    %v191 = vpop.permute.xlu0 %190
    %192 = vrot.lane.b32.xlu0 %v87, 1
    %v193 = vpop.permute.xlu0 %192
    %v210 = vsub.f32 %v72, %v163
    %v211 = vsub.f32 %v73, %v165
    %v212 = vsub.f32 %v74, %v167
    %v213 = vsub.f32 %v75, %v169
    %v214 = vsub.f32 %v76, %v171
    %v215 = vsub.f32 %v77, %v173
    %v216 = vsub.f32 %v78, %v175
    %v217 = vsub.f32 %v79, %v177
    %v218 = vsub.f32 %v80, %v179
    %v219 = vsub.f32 %v81, %v181
    %v220 = vsub.f32 %v82, %v183
    %v221 = vsub.f32 %v83, %v185
    %v222 = vsub.f32 %v84, %v187
    %v223 = vsub.f32 %v85, %v189
    %v224 = vsub.f32 %v86, %v191
    %v225 = vsub.f32 %v87, %v193
    %v226 = vmul.f32 %v210, %v210
    %v227 = vmul.f32 %v211, %v211
    %v228 = vmul.f32 %v212, %v212
    %v229 = vmul.f32 %v213, %v213
    %v230 = vmul.f32 %v214, %v214
    %v231 = vmul.f32 %v215, %v215
    %v232 = vmul.f32 %v216, %v216
    %v233 = vmul.f32 %v217, %v217
    %v234 = vmul.f32 %v218, %v218
    %v235 = vmul.f32 %v219, %v219
    %v236 = vmul.f32 %v220, %v220
    %v237 = vmul.f32 %v221, %v221
    %v238 = vmul.f32 %v222, %v222
    %v239 = vmul.f32 %v223, %v223
    %v240 = vmul.f32 %v224, %v224
    %v241 = vmul.f32 %v225, %v225
    %258 = vrot.lane.b32.xlu0 %v226, 127
    %v259 = vpop.permute.xlu0 %258
    %260 = vrot.lane.b32.xlu0 %v227, 127
    %v261 = vpop.permute.xlu0 %260
    %262 = vrot.lane.b32.xlu0 %v228, 127
    %v263 = vpop.permute.xlu0 %262
    %264 = vrot.lane.b32.xlu0 %v229, 127
    %v265 = vpop.permute.xlu0 %264
    %266 = vrot.lane.b32.xlu0 %v230, 127
    %v267 = vpop.permute.xlu0 %266
    %268 = vrot.lane.b32.xlu0 %v231, 127
    %v269 = vpop.permute.xlu0 %268
    %270 = vrot.lane.b32.xlu0 %v232, 127
    %v271 = vpop.permute.xlu0 %270
    %272 = vrot.lane.b32.xlu0 %v233, 127
    %v273 = vpop.permute.xlu0 %272
    %274 = vrot.lane.b32.xlu0 %v234, 127
    %v275 = vpop.permute.xlu0 %274
    %276 = vrot.lane.b32.xlu0 %v235, 127
    %v277 = vpop.permute.xlu0 %276
    %278 = vrot.lane.b32.xlu0 %v236, 127
    %v279 = vpop.permute.xlu0 %278
    %280 = vrot.lane.b32.xlu0 %v237, 127
    %v281 = vpop.permute.xlu0 %280
    %282 = vrot.lane.b32.xlu0 %v238, 127
    %v283 = vpop.permute.xlu0 %282
    %284 = vrot.lane.b32.xlu0 %v239, 127
    %v285 = vpop.permute.xlu0 %284
    %286 = vrot.lane.b32.xlu0 %v240, 127
    %v287 = vpop.permute.xlu0 %286
    %288 = vrot.lane.b32.xlu0 %v241, 127
    %v289 = vpop.permute.xlu0 %288
    %vm306 = vcmask 121856
    %v307 = vsel %vm306, %v259, 0.0
    %v308 = vsel %vm306, %v261, 0.0
    %v309 = vadd.f32 %v307, %v308
    %v310 = vsel %vm306, %v263, 0.0
    %v311 = vadd.f32 %v309, %v310
    %v312 = vsel %vm306, %v265, 0.0
    %v313 = vadd.f32 %v311, %v312
    %v314 = vsel %vm306, %v267, 0.0
    %v315 = vadd.f32 %v313, %v314
    %v316 = vsel %vm306, %v269, 0.0
    %v317 = vadd.f32 %v315, %v316
    %v318 = vsel %vm306, %v271, 0.0
    %v319 = vadd.f32 %v317, %v318
    %v320 = vsel %vm306, %v273, 0.0
    %v321 = vadd.f32 %v319, %v320
    %v322 = vsel %vm306, %v275, 0.0
    %v323 = vadd.f32 %v321, %v322
    %v324 = vsel %vm306, %v277, 0.0
    %v325 = vadd.f32 %v323, %v324
    %v326 = vsel %vm306, %v279, 0.0
    %v327 = vadd.f32 %v325, %v326
    %v328 = vsel %vm306, %v281, 0.0
    %v329 = vadd.f32 %v327, %v328
    %v330 = vsel %vm306, %v283, 0.0
    %v331 = vadd.f32 %v329, %v330
    %v332 = vsel %vm306, %v285, 0.0
    %v333 = vadd.f32 %v331, %v332
    %v334 = vsel %vm306, %v287, 0.0
    %v335 = vadd.f32 %v333, %v334
    %v336 = vsel %vm306, %v289, 0.0
    %v337 = vadd.f32 %v335, %v336
    %338 = vadd.xlane.f32.xlu0 %v337
    %v339 = vpop.xlane.xlu0 %338
    %v340 = vrot.slane %v339, 4
    %v341 = vadd.f32 %v339, %v340
    %v342 = vrot.slane %v341, 2
    %v343 = vadd.f32 %v341, %v342
    %v344 = vrot.slane %v343, 1
    %v345 = vadd.f32 %v343, %v344
    %s346 = vtos %v345
    %s347 = smul.f32 %s346, 0.1
    %s348 = sadd.f32 %s145, %s347
    %vm349 = vcmask 1040384
    %v350 = vrot.slane %v72, 7
    %v351 = vrot.slane %v73, 7
    %v352 = vsel %vm349, %v350, %v351
    %v353 = vrot.slane %v74, 7
    %v354 = vrot.slane %v75, 7
    %v355 = vsel %vm349, %v353, %v354
    %v356 = vrot.slane %v76, 7
    %v357 = vrot.slane %v77, 7
    %v358 = vsel %vm349, %v356, %v357
    %v359 = vrot.slane %v78, 7
    %v360 = vrot.slane %v79, 7
    %v361 = vsel %vm349, %v359, %v360
    %v362 = vrot.slane %v80, 7
    %v363 = vrot.slane %v81, 7
    %v364 = vsel %vm349, %v362, %v363
    %v365 = vrot.slane %v82, 7
    %v366 = vrot.slane %v83, 7
    %v367 = vsel %vm349, %v365, %v366
    %v368 = vrot.slane %v84, 7
    %v369 = vrot.slane %v85, 7
    %v370 = vsel %vm349, %v368, %v369
    %v371 = vrot.slane %v86, 7
    %v372 = vrot.slane %v87, 7
    %v373 = vsel %vm349, %v371, %v372
    %v390 = vsub.f32 %v72, %v350
    %v391 = vsub.f32 %v73, %v352
    %v392 = vsub.f32 %v74, %v353
    %v393 = vsub.f32 %v75, %v355
    %v394 = vsub.f32 %v76, %v356
    %v395 = vsub.f32 %v77, %v358
    %v396 = vsub.f32 %v78, %v359
    %v397 = vsub.f32 %v79, %v361
    %v398 = vsub.f32 %v80, %v362
    %v399 = vsub.f32 %v81, %v364
    %v400 = vsub.f32 %v82, %v365
    %v401 = vsub.f32 %v83, %v367
    %v402 = vsub.f32 %v84, %v368
    %v403 = vsub.f32 %v85, %v370
    %v404 = vsub.f32 %v86, %v371
    %v405 = vsub.f32 %v87, %v373
    %v406 = vmul.f32 %v390, %v390
    %v407 = vmul.f32 %v391, %v391
    %v408 = vmul.f32 %v392, %v392
    %v409 = vmul.f32 %v393, %v393
    %v410 = vmul.f32 %v394, %v394
    %v411 = vmul.f32 %v395, %v395
    %v412 = vmul.f32 %v396, %v396
    %v413 = vmul.f32 %v397, %v397
    %v414 = vmul.f32 %v398, %v398
    %v415 = vmul.f32 %v399, %v399
    %v416 = vmul.f32 %v400, %v400
    %v417 = vmul.f32 %v401, %v401
    %v418 = vmul.f32 %v402, %v402
    %v419 = vmul.f32 %v403, %v403
    %v420 = vmul.f32 %v404, %v404
    %v421 = vmul.f32 %v405, %v405
    %vm438 = vcmask 1046528
    %v439 = vrot.slane %v406, 1
    %v440 = vrot.slane %v407, 1
    %v441 = vsel %vm438, %v439, %v440
    %v442 = vrot.slane %v408, 1
    %v443 = vrot.slane %v409, 1
    %v444 = vsel %vm438, %v442, %v443
    %v445 = vrot.slane %v410, 1
    %v446 = vrot.slane %v411, 1
    %v447 = vsel %vm438, %v445, %v446
    %v448 = vrot.slane %v412, 1
    %v449 = vrot.slane %v413, 1
    %v450 = vsel %vm438, %v448, %v449
    %v451 = vrot.slane %v414, 1
    %v452 = vrot.slane %v415, 1
    %v453 = vsel %vm438, %v451, %v452
    %v454 = vrot.slane %v416, 1
    %v455 = vrot.slane %v417, 1
    %v456 = vsel %vm438, %v454, %v455
    %v457 = vrot.slane %v418, 1
    %v458 = vrot.slane %v419, 1
    %v459 = vsel %vm438, %v457, %v458
    %v460 = vrot.slane %v420, 1
    %v461 = vrot.slane %v421, 1
    %v462 = vsel %vm438, %v460, %v461
    %v479 = vsel %vm104, %v441, 0.0
    %vm480 = vcmask 129024
    %v481 = vsel %vm480, %v440, 0.0
    %v482 = vadd.f32 %v479, %v481
    %v483 = vsel %vm104, %v444, 0.0
    %v484 = vadd.f32 %v482, %v483
    %v485 = vsel %vm480, %v443, 0.0
    %v486 = vadd.f32 %v484, %v485
    %v487 = vsel %vm104, %v447, 0.0
    %v488 = vadd.f32 %v486, %v487
    %v489 = vsel %vm480, %v446, 0.0
    %v490 = vadd.f32 %v488, %v489
    %v491 = vsel %vm104, %v450, 0.0
    %v492 = vadd.f32 %v490, %v491
    %v493 = vsel %vm480, %v449, 0.0
    %v494 = vadd.f32 %v492, %v493
    %v495 = vsel %vm104, %v453, 0.0
    %v496 = vadd.f32 %v494, %v495
    %v497 = vsel %vm480, %v452, 0.0
    %v498 = vadd.f32 %v496, %v497
    %v499 = vsel %vm104, %v456, 0.0
    %v500 = vadd.f32 %v498, %v499
    %v501 = vsel %vm480, %v455, 0.0
    %v502 = vadd.f32 %v500, %v501
    %v503 = vsel %vm104, %v459, 0.0
    %v504 = vadd.f32 %v502, %v503
    %v505 = vsel %vm480, %v458, 0.0
    %v506 = vadd.f32 %v504, %v505
    %v507 = vsel %vm104, %v462, 0.0
    %v508 = vadd.f32 %v506, %v507
    %v509 = vsel %vm480, %v461, 0.0
    %v510 = vadd.f32 %v508, %v509
    %511 = vadd.xlane.f32.xlu0 %v510
    %v512 = vpop.xlane.xlu0 %511
    %v513 = vrot.slane %v512, 4
    %v514 = vadd.f32 %v512, %v513
    %v515 = vrot.slane %v514, 2
    %v516 = vadd.f32 %v514, %v515
    %v517 = vrot.slane %v516, 1
    %v518 = vadd.f32 %v516, %v517
    %s519 = vtos %v518
    %s520 = smul.f32 %s519, 0.1
    %s521 = sadd.f32 %s348, %s520
    %s522 = smul.f32 %s521, 0.00048828125
    %v523 = vstv %s522
    %524 = vst [vmem:[#allocation7] sm:$0xff] %v523
    // Predicated region
    $region18: #{tpu_custom_call.1} parent=1 // pred_check
      _
    $region19: #{tpu_custom_call.1} parent=1 // pred_check_branch
      %526 = sbr.rel (0) target = $region21
    $region20: #{tpu_custom_call.1} parent=1 // pred_region
      %s528 = ssub.s32 128, 128
      %529 = vsyncadd [#allocation4], %s528
      %s531 = sshll.u32 [#allocation7], 4
      %s532 = int_to_ptr.vmem [resolvable:$true] %s531
      %534 = dma.vmem_to_hbm [thread:$0]  %s532, 128, %s2, [#allocation4]
    $region21: #{tpu_custom_call.1} parent=1 // pred_fallthru
      _
    // Predicated region
    $region22: #{tpu_custom_call.1} parent=1 // pred_check
      _
    $region23: #{tpu_custom_call.1} parent=1 // pred_check_branch
      %536 = sbr.rel (0) target = $region25
    $region24: #{tpu_custom_call.1} parent=1 // pred_region
      %537 = dma.done [#allocation4], 128
    $region25: #{tpu_custom_call.1} parent=1 // pred_fallthru
      _
    %538 = vsyncpa [#allocation3], 1
    %539 = vsyncpa [#allocation6], 1
    %540 = vsyncpa [#allocation4], 1

</llo_original>
